<compile_context>
chip_gen: v7x
topology: tpu7x:2x2x1
jax: 0.10.0
libtpu: 0.0.40
codegen_flags: <defaults>
</compile_context>

<pallas_src>
import jax
import jax.numpy as jnp
from jax.experimental import pallas as pl
from jax.experimental.pallas import tpu as pltpu


def _round_up(x, m):
    return ((x + m - 1) // m) * m


def _cdiv(a, b):
    return (a + b - 1) // b


def _vmem_capacity_bytes():
    """Physical VMEM per TensorCore; conservative fallback if unqueryable."""
    try:
        info = pltpu.get_tpu_info()
        cap = int(getattr(info, "vmem_capacity_bytes", 0) or 0)
        if cap > 0:
            return cap
    except Exception:
        pass
    return 64 * 1024 * 1024  # v7x per-TC size: safe lower bound everywhere


# -----------------------------------------------------------------------------
# Kernel A: weights fully resident in VMEM (single pass over the hidden dim).
# -----------------------------------------------------------------------------
def _head_kernel_resident(x_ref, w1_ref, b1_ref, w2_ref, b2_ref, o_ref):
    # x_ref:  (tm, H)   features tile in original dtype (cast here, in-kernel)
    # w1_ref: (H, H)    dense weight (x @ w1 layout), matmul dtype, resident
    # b1_ref: (1, H)    f32
    # w2_ref: (H, Lp)   out_proj weight (x @ w2 layout), matmul dtype, resident
    # b2_ref: (1, Lp)   f32 (lane-padded)
    # o_ref:  (tm, Lp)  lane-dense output tile
    x = x_ref[...].astype(w1_ref.dtype)          # VPU cast hides under the MXU
    # dropout (eval mode) -> identity
    h = jnp.dot(x, w1_ref[...], preferred_element_type=jnp.float32) + b1_ref[...]
    h = jnp.tanh(h)
    # dropout (eval mode) -> identity
    out = jnp.dot(h.astype(w2_ref.dtype), w2_ref[...],
                  preferred_element_type=jnp.float32) + b2_ref[...]
    o_ref[...] = out.astype(o_ref.dtype)


# -----------------------------------------------------------------------------
# Kernel B: hidden-dim (K) tiled.  For large H / small-VMEM chips (v7x 64 MiB):
# streams w1 in (H, tn) column chunks and w2 in (tn, Lp) row chunks, applies
# bias + tanh per chunk, accumulates the (tm, Lp) output in an f32 scratch.
# -----------------------------------------------------------------------------
def _head_kernel_ktiled(x_ref, w1_ref, b1_ref, w2_ref, b2_ref, o_ref, acc_ref):
    k = pl.program_id(1)

    @pl.when(k == 0)
    def _init():
        acc_ref[...] = jnp.zeros_like(acc_ref)

    x = x_ref[...].astype(w1_ref.dtype)
    h = jnp.dot(x, w1_ref[...], preferred_element_type=jnp.float32) + b1_ref[...]
    h = jnp.tanh(h)
    acc_ref[...] += jnp.dot(h.astype(w2_ref.dtype), w2_ref[...],
                            preferred_element_type=jnp.float32)

    @pl.when(k == pl.num_programs(1) - 1)
    def _finalize():
        o_ref[...] = (acc_ref[...] + b2_ref[...]).astype(o_ref.dtype)


def _pick_tm(M, per_row, fixed, budget):
    avail = budget - fixed
    tm = 8 if avail <= 0 else max(8, min(512, (avail // per_row) // 8 * 8))
    # MXU-native alignment: 256 (v6e/v7x 2x256^2) also satisfies v5e's 128.
    if tm >= 256:
        tm = (tm // 256) * 256
    elif tm >= 128:
        tm = 128
    # Keep >=2 grid steps for large M so the "parallel" axis shards across
    # both v7x TensorCores instead of idling one.
    if M >= 512:
        tm = min(tm, max(256, _round_up(_cdiv(M, 2), 256)))
    return max(8, min(tm, _round_up(M, 8)))


def model_head_forward(features, w1, b1, w2, b2, *, tm=None, tn=None,
                       matmul_dtype=jnp.bfloat16, out_dtype=None,
                       force_k_tiling=False, single_buffer_weights=True):
    """ModelHead forward: out_proj(tanh(dense(features))), dropout = identity.

    features: [B, T, H]; w1: [H, H], b1: [H]  (y = x @ w1 + b1);
    w2: [H, L],  b2: [L].  Returns [B, T, L] in `out_dtype`
    (default: features.dtype; pass jnp.bfloat16 to halve output HBM traffic).
    """
    B, T, H = features.shape
    L = w2.shape[1]
    M = B * T
    out_dtype = features.dtype if out_dtype is None else out_dtype

    md = jnp.dtype(matmul_dtype).itemsize
    xsz = jnp.dtype(features.dtype).itemsize
    osz = jnp.dtype(out_dtype).itemsize

    Lp = _round_up(L, 128)                     # lane-dense output stores

    cap = _vmem_capacity_bytes()
    budget = int(cap * 0.85)                   # headroom for Mosaic internals
    slack = 2 * 1024 * 1024

    # VMEM accounting for the weight-resident path (everything resident).
    wbuf = 1 if single_buffer_weights else 2
    fixed_res = wbuf * (H * H * md + H * Lp * md + H * 4 + Lp * 4) + slack
    # double-buffered x tile, double-buffered out tile, f32 h, bf16 h copy
    per_row_res = 2 * H * xsz + 2 * Lp * osz + H * 4 + H * md

    use_k_tiling = force_k_tiling or (
        fixed_res + max(8, min(256, _round_up(M, 8))) * per_row_res > budget)

    # Flattened activations: no cast, no pad (both handled in-kernel / by
    # Pallas ragged-last-block masking).
    x2d = features.reshape(M, H)

    # Weight-side layout plumbing (small, parameter-sized, one-time).
    w1c = w1.astype(matmul_dtype)
    w2c = w2.astype(matmul_dtype)
    b2f = b2.astype(jnp.float32)
    if Lp != L:
        w2c = jnp.pad(w2c, ((0, 0), (0, Lp - L)))
        b2f = jnp.pad(b2f, ((0, Lp - L),))
    b2r = b2f.reshape(1, Lp)

    cost = pl.CostEstimate(
        flops=2 * M * H * (H + Lp),
        transcendentals=M * H,
        bytes_accessed=(M * H * xsz + H * H * md + H * Lp * md
                        + M * Lp * osz + (H + Lp) * 4),
    )

    if not use_k_tiling:
        # ------------------------- resident-weight path -------------------------
        b1r = b1.astype(jnp.float32).reshape(1, H)

        if tm is None:
            tm_sel = _pick_tm(M, per_row_res, fixed_res, budget)
        else:
            tm_sel = max(8, min(_round_up(tm, 8), _round_up(M, 8)))
        grid_m = _cdiv(M, tm_sel)

        # Size the scoped-VMEM limit off the worst case (double-buffered
        # weights) so the single-buffer fallback path also fits.
        need = (2 * (H * H * md + H * Lp * md + H * 4 + Lp * 4)
                + tm_sel * per_row_res + 2 * slack)
        vmem_limit = min(int(cap * 0.9), max(need, 32 * 1024 * 1024))

        def _call(single_buf):
            def w_spec(shape):
                if single_buf:
                    return pl.BlockSpec(shape, lambda i: (0, 0),
                                        pipeline_mode=pl.Buffered(1))
                return pl.BlockSpec(shape, lambda i: (0, 0))

            return pl.pallas_call(
                _head_kernel_resident,
                out_shape=jax.ShapeDtypeStruct((M, Lp), out_dtype),
                grid_spec=pltpu.PrefetchScalarGridSpec(
                    num_scalar_prefetch=0,
                    grid=(grid_m,),
                    in_specs=[
                        pl.BlockSpec((tm_sel, H), lambda i: (i, 0)),  # x tile
                        w_spec((H, H)),        # dense weight (resident)
                        w_spec((1, H)),        # dense bias
                        w_spec((H, Lp)),       # out_proj weight (resident)
                        w_spec((1, Lp)),       # out_proj bias
                    ],
                    out_specs=pl.BlockSpec((tm_sel, Lp), lambda i: (i, 0)),
                ),
                compiler_params=pltpu.CompilerParams(
                    dimension_semantics=("parallel",),
                    vmem_limit_bytes=vmem_limit),
                cost_estimate=cost,
            )(x2d, w1c, b1r, w2c, b2r)

        if single_buffer_weights:
            try:
                out2d = _call(True)
            except Exception:
                # Runtime without pipeline_mode/Buffered(1) support.
                out2d = _call(False)
        else:
            out2d = _call(False)

    else:
        # --------------------------- K-tiled path -------------------------------
        if tn is None:
            tn_sel = min(512, _round_up(min(H, 256), 128))
        else:
            tn_sel = min(_round_up(tn, 128), _round_up(H, 128))
        Hp = _round_up(H, tn_sel)
        grid_k = Hp // tn_sel

        # Zero-pad the chunked hidden axis; padding contributes exactly zero:
        # tanh(x @ 0 + 0) @ 0 == 0.
        b1f = b1.astype(jnp.float32)
        if Hp != H:
            w1c = jnp.pad(w1c, ((0, 0), (0, Hp - H)))
            w2c = jnp.pad(w2c, ((0, Hp - H), (0, 0)))
            b1f = jnp.pad(b1f, ((0, Hp - H),))
        b1r = b1f.reshape(1, Hp)

        fixed_k = (2 * (H * tn_sel + tn_sel * Lp) * md + 2 * tn_sel * 4
                   + Lp * 4 + slack)
        per_row_k = (2 * H * xsz + 2 * Lp * osz + Lp * 4     # x dbl, out dbl, acc
                     + tn_sel * 4 + tn_sel * md)             # h chunk f32 + bf16

        if tm is None:
            tm_sel = _pick_tm(M, per_row_k, fixed_k, budget)
        else:
            tm_sel = max(8, min(_round_up(tm, 8), _round_up(M, 8)))
        grid_m = _cdiv(M, tm_sel)
        vmem_limit = min(int(cap * 0.9),
                         max(fixed_k + tm_sel * per_row_k + slack,
                             32 * 1024 * 1024))

        out2d = pl.pallas_call(
            _head_kernel_ktiled,
            out_shape=jax.ShapeDtypeStruct((M, Lp), out_dtype),
            grid_spec=pltpu.PrefetchScalarGridSpec(
                num_scalar_prefetch=0,
                grid=(grid_m, grid_k),
                in_specs=[
                    pl.BlockSpec((tm_sel, H), lambda i, k: (i, 0)),   # x (reused over k)
                    pl.BlockSpec((H, tn_sel), lambda i, k: (0, k)),   # w1 column chunk
                    pl.BlockSpec((1, tn_sel), lambda i, k: (0, k)),   # b1 chunk
                    pl.BlockSpec((tn_sel, Lp), lambda i, k: (k, 0)),  # w2 row chunk
                    pl.BlockSpec((1, Lp), lambda i, k: (0, 0)),       # b2
                ],
                out_specs=pl.BlockSpec((tm_sel, Lp), lambda i, k: (i, 0)),
                scratch_shapes=[pltpu.VMEM((tm_sel, Lp), jnp.float32)],
            ),
            compiler_params=pltpu.CompilerParams(
                dimension_semantics=("parallel", "arbitrary"),
                vmem_limit_bytes=vmem_limit),
            cost_estimate=cost,
        )(x2d, w1c, b1r, w2c, b2r)

    return out2d[:, :L].reshape(B, T, L)


if __name__ == "__main__":
    # Small shapes consistent with the module: hidden_size=32, num_labels=4.
    B, T, H, L = 2, 8, 32, 4

    key = jax.random.PRNGKey(0)
    k_x, k_w1, k_b1, k_w2, k_b2 = jax.random.split(key, 5)

    features = jax.random.normal(k_x, (B, T, H), dtype=jnp.float32)

    # nn.Linear(hidden, hidden): weight [H, H], bias [H]; y = x @ W.T + b
    dense_w = jax.random.normal(k_w1, (H, H), dtype=jnp.float32) * 0.05
    dense_b = jax.random.normal(k_b1, (H,), dtype=jnp.float32) * 0.05
    # nn.Linear(hidden, num_labels): weight [L, H], bias [L]
    out_w = jax.random.normal(k_w2, (L, H), dtype=jnp.float32) * 0.05
    out_b = jax.random.normal(k_b2, (L,), dtype=jnp.float32) * 0.05

    w1 = dense_w.T          # [H, H]  so the kernel does x @ w1
    w2 = out_w.T            # [H, L]

    out = model_head_forward(features, w1, dense_b, w2, out_b)
    out = jax.block_until_ready(out)
    assert out.shape == (B, T, L)

    # Reference with the same bf16 operand casts / f32 accumulation.
    def ref_bf16(x, w1_, b1_, w2_, b2_):
        Hh = x.shape[-1]
        xb = x.reshape(-1, Hh).astype(jnp.bfloat16)
        h = jnp.tanh(jnp.dot(xb, w1_.astype(jnp.bfloat16),
                             preferred_element_type=jnp.float32) + b1_)
        o = jnp.dot(h.astype(jnp.bfloat16), w2_.astype(jnp.bfloat16),
                    preferred_element_type=jnp.float32) + b2_
        return o.reshape(x.shape[:-1] + (w2_.shape[1],))

    ref = ref_bf16(features, w1, dense_b, w2, out_b)
    assert jnp.allclose(out, ref, atol=5e-4, rtol=5e-3)

    # Loose sanity check against the pure-f32 math of the PyTorch module.
    ref_f32 = jnp.tanh(features @ w1 + dense_b) @ w2 + out_b
    assert jnp.allclose(out, ref_f32, atol=3e-2, rtol=3e-2)

    # Also exercise the hidden-dim-tiled fallback (the v7x large-H path) at a
    # modest size: H=256 with tn=128 -> 2 K-chunks.
    B2, T2, H2, L2 = 2, 64, 256, 4
    kk = jax.random.split(jax.random.PRNGKey(0), 5)
    f2 = jax.random.normal(kk[0], (B2, T2, H2), dtype=jnp.float32)
    w1b = jax.random.normal(kk[1], (H2, H2), dtype=jnp.float32) * 0.05
    b1b = jax.random.normal(kk[2], (H2,), dtype=jnp.float32) * 0.05
    w2b = jax.random.normal(kk[3], (H2, L2), dtype=jnp.float32) * 0.05
    b2b = jax.random.normal(kk[4], (L2,), dtype=jnp.float32) * 0.05

    out2 = model_head_forward(f2, w1b, b1b, w2b, b2b,
                              force_k_tiling=True, tn=128)
    out2 = jax.block_until_ready(out2)
    assert out2.shape == (B2, T2, L2)
    ref2 = ref_bf16(f2, w1b, b1b, w2b, b2b)
    assert jnp.allclose(out2, ref2, atol=5e-3, rtol=1e-2)

    print("KERNEL_OK")
</pallas_src>

<mosaic_0001>
module attributes {stable_mosaic.version = 11 : i64} {
  func.func @_head_kernel_resident(%arg0: i32, %arg1: memref<16x32xf32, #tpu.memory_space<vmem>>, %arg2: memref<32x32xbf16, #tpu.memory_space<vmem>>, %arg3: memref<1x32xf32, #tpu.memory_space<vmem>>, %arg4: memref<32x128xbf16, #tpu.memory_space<vmem>>, %arg5: memref<1x128xf32, #tpu.memory_space<vmem>>, %arg6: memref<16x128xf32, #tpu.memory_space<vmem>>) attributes {dimension_semantics = [#tpu.dimension_semantics<parallel>], iteration_bounds = array<i64: 1>, scalar_prefetch = 0 : i64, scratch_operands = 0 : i64, tpu.core_type = #tpu.core_type<tc>, window_params = [{transform_indices = @transform_0, window_bounds = array<i64: 16, 32>}, {pipeline_mode = #tpu.pipeline_mode<synchronous>, transform_indices = @transform_1, window_bounds = array<i64: 32, 32>}, {pipeline_mode = #tpu.pipeline_mode<synchronous>, transform_indices = @transform_2, window_bounds = array<i64: 1, 32>}, {pipeline_mode = #tpu.pipeline_mode<synchronous>, transform_indices = @transform_3, window_bounds = array<i64: 32, 128>}, {pipeline_mode = #tpu.pipeline_mode<synchronous>, transform_indices = @transform_4, window_bounds = array<i64: 1, 128>}, {transform_indices = @transform_5, window_bounds = array<i64: 16, 128>}]} {
    %c0 = arith.constant 0 : index
    %c0_0 = arith.constant 0 : index
    %0 = vector.load %arg1[%c0, %c0_0] : memref<16x32xf32, #tpu.memory_space<vmem>>, vector<16x32xf32>
    %1 = arith.truncf %0 : vector<16x32xf32> to vector<16x32xbf16>
    %c0_1 = arith.constant 0 : index
    %c0_2 = arith.constant 0 : index
    %2 = vector.load %arg2[%c0_1, %c0_2] : memref<32x32xbf16, #tpu.memory_space<vmem>>, vector<32x32xbf16>
    %cst = arith.constant dense<0.000000e+00> : vector<16x32xf32>
    %3 = tpu.matmul %1, %2, %cst {dimension_numbers = #tpu.dot_dimension_numbers<[1], [0], [0], [1], [0, 0, 1, 1], [], []>} : vector<16x32xbf16>, vector<32x32xbf16>, vector<16x32xf32> -> vector<16x32xf32>
    %c0_3 = arith.constant 0 : index
    %c0_4 = arith.constant 0 : index
    %4 = vector.load %arg3[%c0_3, %c0_4] : memref<1x32xf32, #tpu.memory_space<vmem>>, vector<1x32xf32>
    %5 = vector.broadcast %4 : vector<1x32xf32> to vector<16x32xf32>
    %6 = arith.addf %3, %5 : vector<16x32xf32>
    %7 = math.tanh %6 : vector<16x32xf32>
    %8 = arith.truncf %7 : vector<16x32xf32> to vector<16x32xbf16>
    %c0_5 = arith.constant 0 : index
    %c0_6 = arith.constant 0 : index
    %9 = vector.load %arg4[%c0_5, %c0_6] : memref<32x128xbf16, #tpu.memory_space<vmem>>, vector<32x128xbf16>
    %cst_7 = arith.constant dense<0.000000e+00> : vector<16x128xf32>
    %10 = tpu.matmul %8, %9, %cst_7 {dimension_numbers = #tpu.dot_dimension_numbers<[1], [0], [0], [1], [0, 0, 1, 1], [], []>} : vector<16x32xbf16>, vector<32x128xbf16>, vector<16x128xf32> -> vector<16x128xf32>
    %c0_8 = arith.constant 0 : index
    %c0_9 = arith.constant 0 : index
    %11 = vector.load %arg5[%c0_8, %c0_9] : memref<1x128xf32, #tpu.memory_space<vmem>>, vector<1x128xf32>
    %12 = vector.broadcast %11 : vector<1x128xf32> to vector<16x128xf32>
    %13 = arith.addf %10, %12 : vector<16x128xf32>
    %c0_10 = arith.constant 0 : index
    %c0_11 = arith.constant 0 : index
    %14 = vector.load %arg6[%c0_10, %c0_11] : memref<16x128xf32, #tpu.memory_space<vmem>>, vector<16x128xf32>
    tpu.vector_store %arg6[%c0_10, %c0_11], %13 {strides = array<i32>} : memref<16x128xf32, #tpu.memory_space<vmem>>, vector<16x128xf32>,
    return
  }
  func.func @transform_0(%arg0: i32) -> (i32, i32) {
    %c0_i32 = arith.constant 0 : i32
    %c0_i32_0 = arith.constant 0 : i32
    return %arg0, %c0_i32 : i32, i32
  }
  func.func @transform_1(%arg0: i32) -> (i32, i32) {
    %c0_i32 = arith.constant 0 : i32
    %c0_i32_0 = arith.constant 0 : i32
    %c0_i32_1 = arith.constant 0 : i32
    return %c0_i32, %c0_i32_0 : i32, i32
  }
  func.func @transform_2(%arg0: i32) -> (i32, i32) {
    %c0_i32 = arith.constant 0 : i32
    %c0_i32_0 = arith.constant 0 : i32
    %c0_i32_1 = arith.constant 0 : i32
    return %c0_i32, %c0_i32_0 : i32, i32
  }
  func.func @transform_3(%arg0: i32) -> (i32, i32) {
    %c0_i32 = arith.constant 0 : i32
    %c0_i32_0 = arith.constant 0 : i32
    %c0_i32_1 = arith.constant 0 : i32
    return %c0_i32, %c0_i32_0 : i32, i32
  }
  func.func @transform_4(%arg0: i32) -> (i32, i32) {
    %c0_i32 = arith.constant 0 : i32
    %c0_i32_0 = arith.constant 0 : i32
    %c0_i32_1 = arith.constant 0 : i32
    return %c0_i32, %c0_i32_0 : i32, i32
  }
  func.func @transform_5(%arg0: i32) -> (i32, i32) {
    %c0_i32 = arith.constant 0 : i32
    %c0_i32_0 = arith.constant 0 : i32
    return %arg0, %c0_i32 : i32, i32
  }
}

module attributes {stable_mosaic.version = 11 : i64} {
  func.func @_head_kernel_resident(%arg0: i32, %arg1: memref<16x32xf32, #tpu.memory_space<vmem>>, %arg2: memref<32x32xbf16, #tpu.memory_space<vmem>>, %arg3: memref<1x32xf32, #tpu.memory_space<vmem>>, %arg4: memref<32x128xbf16, #tpu.memory_space<vmem>>, %arg5: memref<1x128xf32, #tpu.memory_space<vmem>>, %arg6: memref<16x128xf32, #tpu.memory_space<vmem>>) attributes {dimension_semantics = [#tpu.dimension_semantics<parallel>], iteration_bounds = array<i64: 1>, scalar_prefetch = 0 : i64, scratch_operands = 0 : i64, tpu.core_type = #tpu.core_type<tc>, window_params = [{transform_indices = @transform_0, window_bounds = array<i64: 16, 32>}, {pipeline_mode = #tpu.pipeline_mode<synchronous>, transform_indices = @transform_1, window_bounds = array<i64: 32, 32>}, {pipeline_mode = #tpu.pipeline_mode<synchronous>, transform_indices = @transform_2, window_bounds = array<i64: 1, 32>}, {pipeline_mode = #tpu.pipeline_mode<synchronous>, transform_indices = @transform_3, window_bounds = array<i64: 32, 128>}, {pipeline_mode = #tpu.pipeline_mode<synchronous>, transform_indices = @transform_4, window_bounds = array<i64: 1, 128>}, {transform_indices = @transform_5, window_bounds = array<i64: 16, 128>}]} {
    %c0 = arith.constant 0 : index
    %c0_0 = arith.constant 0 : index
    %0 = vector.load %arg1[%c0, %c0_0] : memref<16x32xf32, #tpu.memory_space<vmem>>, vector<16x32xf32>
    %1 = arith.truncf %0 : vector<16x32xf32> to vector<16x32xbf16>
    %c0_1 = arith.constant 0 : index
    %c0_2 = arith.constant 0 : index
    %2 = vector.load %arg2[%c0_1, %c0_2] : memref<32x32xbf16, #tpu.memory_space<vmem>>, vector<32x32xbf16>
    %cst = arith.constant dense<0.000000e+00> : vector<16x32xf32>
    %3 = tpu.matmul %1, %2, %cst {dimension_numbers = #tpu.dot_dimension_numbers<[1], [0], [0], [1], [0, 0, 1, 1], [], []>} : vector<16x32xbf16>, vector<32x32xbf16>, vector<16x32xf32> -> vector<16x32xf32>
    %c0_3 = arith.constant 0 : index
    %c0_4 = arith.constant 0 : index
    %4 = vector.load %arg3[%c0_3, %c0_4] : memref<1x32xf32, #tpu.memory_space<vmem>>, vector<1x32xf32>
    %5 = vector.broadcast %4 : vector<1x32xf32> to vector<16x32xf32>
    %6 = arith.addf %3, %5 : vector<16x32xf32>
    %7 = math.tanh %6 : vector<16x32xf32>
    %8 = arith.truncf %7 : vector<16x32xf32> to vector<16x32xbf16>
    %c0_5 = arith.constant 0 : index
    %c0_6 = arith.constant 0 : index
    %9 = vector.load %arg4[%c0_5, %c0_6] : memref<32x128xbf16, #tpu.memory_space<vmem>>, vector<32x128xbf16>
    %cst_7 = arith.constant dense<0.000000e+00> : vector<16x128xf32>
    %10 = tpu.matmul %8, %9, %cst_7 {dimension_numbers = #tpu.dot_dimension_numbers<[1], [0], [0], [1], [0, 0, 1, 1], [], []>} : vector<16x32xbf16>, vector<32x128xbf16>, vector<16x128xf32> -> vector<16x128xf32>
    %c0_8 = arith.constant 0 : index
    %c0_9 = arith.constant 0 : index
    %11 = vector.load %arg5[%c0_8, %c0_9] : memref<1x128xf32, #tpu.memory_space<vmem>>, vector<1x128xf32>
    %12 = vector.broadcast %11 : vector<1x128xf32> to vector<16x128xf32>
    %13 = arith.addf %10, %12 : vector<16x128xf32>
    %c0_10 = arith.constant 0 : index
    %c0_11 = arith.constant 0 : index
    %14 = vector.load %arg6[%c0_10, %c0_11] : memref<16x128xf32, #tpu.memory_space<vmem>>, vector<16x128xf32>
    tpu.vector_store %arg6[%c0_10, %c0_11], %13 {strides = array<i32>} : memref<16x128xf32, #tpu.memory_space<vmem>>, vector<16x128xf32>,
    return
  }
  func.func @transform_0(%arg0: i32) -> (i32, i32) {
    %c0_i32 = arith.constant 0 : i32
    %c0_i32_0 = arith.constant 0 : i32
    return %arg0, %c0_i32 : i32, i32
  }
  func.func @transform_1(%arg0: i32) -> (i32, i32) {
    %c0_i32 = arith.constant 0 : i32
    %c0_i32_0 = arith.constant 0 : i32
    %c0_i32_1 = arith.constant 0 : i32
    return %c0_i32, %c0_i32_0 : i32, i32
  }
  func.func @transform_2(%arg0: i32) -> (i32, i32) {
    %c0_i32 = arith.constant 0 : i32
    %c0_i32_0 = arith.constant 0 : i32
    %c0_i32_1 = arith.constant 0 : i32
    return %c0_i32, %c0_i32_0 : i32, i32
  }
  func.func @transform_3(%arg0: i32) -> (i32, i32) {
    %c0_i32 = arith.constant 0 : i32
    %c0_i32_0 = arith.constant 0 : i32
    %c0_i32_1 = arith.constant 0 : i32
    return %c0_i32, %c0_i32_0 : i32, i32
  }
  func.func @transform_4(%arg0: i32) -> (i32, i32) {
    %c0_i32 = arith.constant 0 : i32
    %c0_i32_0 = arith.constant 0 : i32
    %c0_i32_1 = arith.constant 0 : i32
    return %c0_i32, %c0_i32_0 : i32, i32
  }
  func.func @transform_5(%arg0: i32) -> (i32, i32) {
    %c0_i32 = arith.constant 0 : i32
    %c0_i32_0 = arith.constant 0 : i32
    return %arg0, %c0_i32 : i32, i32
  }
}

</mosaic_0001>

<llo_original>
// kernel: tpu_custom_call.1
$region0: #{tpu_custom_call.1}
  #allocation0 [shape = 'u32[]', space=smem, size = 0x4, offset = 0x4, fixed_abs, tag = 'smem constant byte address 0x4 - core index']
  #allocation1 [shape = 'u32[144,128]{1,0:T(1,128)}', space=vmem, size = 0x12000, scoped, tag = 'internal scratch']
  %s0 = inlined_call_operand.hbm [shape: f32[16,32], index: 0, kind: input, shape index: {}]
  %s1 = inlined_call_operand.hbm [shape: bf16[32,32], index: 1, kind: input, shape index: {}]
  %s2 = inlined_call_operand.vmem [shape: f32[1,32], index: 2, kind: input, shape index: {}]
  %s3 = inlined_call_operand.hbm [shape: bf16[32,128], index: 3, kind: input, shape index: {}]
  %s4 = inlined_call_operand.vmem [shape: f32[1,128], index: 4, kind: input, shape index: {}]
  %s5 = inlined_call_operand.hbm [shape: f32[16,128], index: 5, kind: output, shape index: {}]
  %s6 = sld [smem:[#allocation0]]
  $region42: #{tpu_custom_call.1} parent=0
    _
  %s8 = ssub.s32 1, %s6
  %s9 = scalar_select 0, %s8, %s6
  $region1: #{tpu_custom_call.1} parent=0
    #allocation2 [shape = 'u8[8192]{0}', space=vmem, size = 0x2000, scoped, tag = 'input window, operand 0, single buffered']
    #allocation3 [shape = 's32[1]{0}', space=sflag, size = 0x4, scoped, tag = 'scoped memory for tpu_custom_call.1']
    #allocation4 [shape = 's32[1]{0}', space=sflag, size = 0x4, scoped, tag = 'scoped memory for tpu_custom_call.1']
    #allocation5 [shape = 'u8[8192]{0}', space=vmem, size = 0x2000, scoped, tag = 'input window, operand 1, single buffered']
    #allocation6 [shape = 's32[1]{0}', space=sflag, size = 0x4, scoped, tag = 'scoped memory for tpu_custom_call.1']
    #allocation7 [shape = 'u8[8192]{0}', space=vmem, size = 0x2000, scoped, tag = 'input window, operand 3, single buffered']
    #allocation8 [shape = 'u8[8192]{0}', space=vmem, size = 0x2000, scoped, tag = 'output window, operand 0, single buffered']
    %10 = vsyncpa [#allocation3], 0
    %11 = vsyncpa [#allocation6], 0
    %12 = vsyncpa [#allocation4], 0
    // Predicated region
    $region2: #{tpu_custom_call.1} parent=1 // pred_check
      _
    $region3: #{tpu_custom_call.1} parent=1 // pred_check_branch
      %14 = sbr.rel (0) target = $region5
    $region4: #{tpu_custom_call.1} parent=1 // pred_region
      %s16 = ssub.s32 256, 256
      %17 = vsyncadd [#allocation3], %s16
      %s18 = sshll.u32 [#allocation2], 4
      %s19 = int_to_ptr.vmem [resolvable:$true] %s18
      %24 = dma.hbm_to_vmem [thread:$0]  %s0, 256, %s19, [#allocation3], 128, 128, 8
    $region5: #{tpu_custom_call.1} parent=1 // pred_fallthru
      _
    // Predicated region
    $region6: #{tpu_custom_call.1} parent=1 // pred_check
      _
    $region7: #{tpu_custom_call.1} parent=1 // pred_check_branch
      %26 = sbr.rel (0) target = $region9
    $region8: #{tpu_custom_call.1} parent=1 // pred_region
      %s28 = ssub.s32 256, 256
      %29 = vsyncadd [#allocation6], %s28
      %s30 = sshll.u32 [#allocation5], 4
      %s31 = int_to_ptr.vmem [resolvable:$true] %s30
      %36 = dma.hbm_to_vmem [thread:$0]  %s1, 256, %s31, [#allocation6], 64, 64, 4
    $region9: #{tpu_custom_call.1} parent=1 // pred_fallthru
      _
    // Predicated region
    $region10: #{tpu_custom_call.1} parent=1 // pred_check
      _
    $region11: #{tpu_custom_call.1} parent=1 // pred_check_branch
      %38 = sbr.rel (0) target = $region13
    $region12: #{tpu_custom_call.1} parent=1 // pred_region
      _
    $region13: #{tpu_custom_call.1} parent=1 // pred_fallthru
      _
    // Predicated region
    $region14: #{tpu_custom_call.1} parent=1 // pred_check
      _
    $region15: #{tpu_custom_call.1} parent=1 // pred_check_branch
      %40 = sbr.rel (0) target = $region17
    $region16: #{tpu_custom_call.1} parent=1 // pred_region
      %s42 = ssub.s32 256, 256
      %43 = vsyncadd [#allocation6], %s42
      %s44 = sshll.u32 [#allocation7], 4
      %s45 = int_to_ptr.vmem [resolvable:$true] %s44
      %50 = dma.hbm_to_vmem [thread:$0]  %s3, 256, %s45, [#allocation6], 64, 64, 4
    $region17: #{tpu_custom_call.1} parent=1 // pred_fallthru
      _
    // Predicated region
    $region18: #{tpu_custom_call.1} parent=1 // pred_check
      _
    $region19: #{tpu_custom_call.1} parent=1 // pred_check_branch
      %52 = sbr.rel (0) target = $region21
    $region20: #{tpu_custom_call.1} parent=1 // pred_region
      _
    $region21: #{tpu_custom_call.1} parent=1 // pred_fallthru
      _
    // Predicated region
    $region22: #{tpu_custom_call.1} parent=1 // pred_check
      _
    $region23: #{tpu_custom_call.1} parent=1 // pred_check_branch
      %54 = sbr.rel (0) target = $region25
    $region24: #{tpu_custom_call.1} parent=1 // pred_region
      %55 = dma.done [#allocation3], 256
    $region25: #{tpu_custom_call.1} parent=1 // pred_fallthru
      _
    // Predicated region
    $region26: #{tpu_custom_call.1} parent=1 // pred_check
      _
    $region27: #{tpu_custom_call.1} parent=1 // pred_check_branch
      %57 = sbr.rel (0) target = $region29
    $region28: #{tpu_custom_call.1} parent=1 // pred_region
      %58 = dma.done [#allocation6], 256
    $region29: #{tpu_custom_call.1} parent=1 // pred_fallthru
      _
    // Predicated region
    $region30: #{tpu_custom_call.1} parent=1 // pred_check
      _
    $region31: #{tpu_custom_call.1} parent=1 // pred_check_branch
      %60 = sbr.rel (0) target = $region33
    $region32: #{tpu_custom_call.1} parent=1 // pred_region
      %61 = dma.done [#allocation6], 256
    $region33: #{tpu_custom_call.1} parent=1 // pred_fallthru
      _
    %v63 = vld [vmem:[#allocation2] sm:$0xff]
    %v64 = vld [vmem:[#allocation2 + $0x8] sm:$0xff]
    %v65 = vpack.c.bf16 %v64, %v63
    %v66 = vld [vmem:[#allocation5] sm:$0xf]
    %v67 = vld [vmem:[#allocation5 + $0x4] sm:$0xf]
    %v68 = vld [vmem:[#allocation5 + $0x8] sm:$0xf]
    %v69 = vld [vmem:[#allocation5 + $0xc] sm:$0xf]
    %v70 = vld [vmem:[%s2] sm:$0x1]
    %v72 = vlaneseq
    %v73 = vshrl.u32 %v72, 7
    %v74 = vsub.s32 0, %v73
    %v75 = vrot.slane %v70, %v74
    %v81 = vunpack.c.l.b16 %v66
    %v82 = vunpack.c.l.b16 %v67
    %v83 = vunpack.c.l.b16 %v68
    %v84 = vunpack.c.l.b16 %v69
    %v85 = vpack.c.b16 %v82, %v81
    %v86 = vpack.c.b16 %v84, %v83
    %vm89 = vcmask 261120
    %v91 = vsel %vm89, %v65, 0
    %93 = vmatprep.subr.bf16.mxu0 0
    %94 = vmatpush1.bf16.msra.mxu0 %v85
    %95 = vmatprep.subr.bf16.mxu0 0
    %96 = vmatpush1.bf16.msra.mxu0 %v86
    %97 = vmatprep.subr.bf16.mxu0 0
    %98 = vmatpush1.bf16.msra.mxu0 0
    %99 = vmatprep.subr.bf16.mxu0 0
    %100 = vmatpush1.bf16.msra.mxu0 0
    %101 = vmatprep.subr.bf16.mxu0 0
    %102 = vmatpush1.bf16.msra.mxu0 0
    %103 = vmatprep.subr.bf16.mxu0 0
    %104 = vmatpush1.bf16.msra.mxu0 0
    %105 = vmatprep.subr.bf16.mxu0 0
    %106 = vmatpush1.bf16.msra.mxu0 0
    %107 = vmatprep.subr.bf16.mxu0 0
    %108 = vmatpush1.bf16.msra.mxu0 0
    %109 = vmatprep.subr.bf16.mxu0 0
    %110 = vmatpush1.bf16.msra.mxu0 0
    %111 = vmatprep.subr.bf16.mxu0 0
    %112 = vmatpush1.bf16.msra.mxu0 0
    %113 = vmatprep.subr.bf16.mxu0 0
    %114 = vmatpush1.bf16.msra.mxu0 0
    %115 = vmatprep.subr.bf16.mxu0 0
    %116 = vmatpush1.bf16.msra.mxu0 0
    %117 = vmatprep.subr.bf16.mxu0 0
    %118 = vmatpush1.bf16.msra.mxu0 0
    %119 = vmatprep.subr.bf16.mxu0 0
    %120 = vmatpush1.bf16.msra.mxu0 0
    %121 = vmatprep.subr.bf16.mxu0 0
    %122 = vmatpush1.bf16.msra.mxu0 0
    %123 = vmatprep.subr.bf16.mxu0 0
    %124 = vmatpush1.bf16.msra.mxu0 0
    %125 = vmatprep.mubr.bf16.mxu0 0
    %126 = vmatmul.mubr.bf16.gmra.mrb[0].mxu0 %v91
    %v127 = vpop.f32.mrb[0].mxu0
    %v128 = vadd.f32 %v75, %v127
    %v129 = vpop.f32.mrb[0].mxu0
    %v130 = vpop.f32.mrb[0].mxu0
    %v131 = vadd.f32 %v75, %v130
    %v132 = vpop.f32.mrb[0].mxu0
    %133 = vdwg.mxu0
    %v134 = vtanh.pop %v128
    %v135 = vtanh.pop %v131
    %v136 = vpack.c.bf16 %v135, %v134
    %v137 = vld [vmem:[#allocation7] sm:$0xf]
    %v138 = vld [vmem:[#allocation7 + $0x4] sm:$0xf]
    %v139 = vld [vmem:[#allocation7 + $0x8] sm:$0xf]
    %v140 = vld [vmem:[#allocation7 + $0xc] sm:$0xf]
    %v141 = vld [vmem:[%s4] sm:$0x1]
    %v143 = vlaneseq
    %v144 = vshrl.u32 %v143, 7
    %v145 = vsub.s32 0, %v144
    %v146 = vrot.slane %v141, %v145
    %v152 = vunpack.c.l.b16 %v137
    %v153 = vunpack.c.l.b16 %v138
    %v154 = vunpack.c.l.b16 %v139
    %v155 = vunpack.c.l.b16 %v140
    %v156 = vpack.c.b16 %v153, %v152
    %v157 = vpack.c.b16 %v155, %v154
    %v161 = vsel %vm89, %v136, 0
    %163 = vmatprep.subr.bf16.mxu0 0
    %164 = vmatpush1.bf16.msra.mxu0 %v156
    %165 = vmatprep.subr.bf16.mxu0 0
    %166 = vmatpush1.bf16.msra.mxu0 %v157
    %167 = vmatprep.subr.bf16.mxu0 0
    %168 = vmatpush1.bf16.msra.mxu0 0
    %169 = vmatprep.subr.bf16.mxu0 0
    %170 = vmatpush1.bf16.msra.mxu0 0
    %171 = vmatprep.subr.bf16.mxu0 0
    %172 = vmatpush1.bf16.msra.mxu0 0
    %173 = vmatprep.subr.bf16.mxu0 0
    %174 = vmatpush1.bf16.msra.mxu0 0
    %175 = vmatprep.subr.bf16.mxu0 0
    %176 = vmatpush1.bf16.msra.mxu0 0
    %177 = vmatprep.subr.bf16.mxu0 0
    %178 = vmatpush1.bf16.msra.mxu0 0
    %179 = vmatprep.subr.bf16.mxu0 0
    %180 = vmatpush1.bf16.msra.mxu0 0
    %181 = vmatprep.subr.bf16.mxu0 0
    %182 = vmatpush1.bf16.msra.mxu0 0
    %183 = vmatprep.subr.bf16.mxu0 0
    %184 = vmatpush1.bf16.msra.mxu0 0
    %185 = vmatprep.subr.bf16.mxu0 0
    %186 = vmatpush1.bf16.msra.mxu0 0
    %187 = vmatprep.subr.bf16.mxu0 0
    %188 = vmatpush1.bf16.msra.mxu0 0
    %189 = vmatprep.subr.bf16.mxu0 0
    %190 = vmatpush1.bf16.msra.mxu0 0
    %191 = vmatprep.subr.bf16.mxu0 0
    %192 = vmatpush1.bf16.msra.mxu0 0
    %193 = vmatprep.subr.bf16.mxu0 0
    %194 = vmatpush1.bf16.msra.mxu0 0
    %195 = vmatprep.mubr.bf16.mxu0 0
    %196 = vmatmul.mubr.bf16.gmra.mrb[0].mxu0 %v161
    %v197 = vpop.f32.mrb[0].mxu0
    %v198 = vadd.f32 %v146, %v197
    %v199 = vpop.f32.mrb[0].mxu0
    %v200 = vpop.f32.mrb[0].mxu0
    %v201 = vadd.f32 %v146, %v200
    %v202 = vpop.f32.mrb[0].mxu0
    %203 = vdwg.mxu0
    %204 = vst [vmem:[#allocation8] sm:$0xff] %v198
    %205 = vst [vmem:[#allocation8 + $0x8] sm:$0xff] %v201
    // Predicated region
    $region34: #{tpu_custom_call.1} parent=1 // pred_check
      _
    $region35: #{tpu_custom_call.1} parent=1 // pred_check_branch
      %207 = sbr.rel (0) target = $region37
    $region36: #{tpu_custom_call.1} parent=1 // pred_region
      %s209 = ssub.s32 256, 256
      %210 = vsyncadd [#allocation4], %s209
      %s211 = sshll.u32 [#allocation8], 4
      %s212 = int_to_ptr.vmem [resolvable:$true] %s211
      %217 = dma.vmem_to_hbm [thread:$0]  %s212, 256, %s5, [#allocation4], 128, 128, 8
    $region37: #{tpu_custom_call.1} parent=1 // pred_fallthru
      _
    // Predicated region
    $region38: #{tpu_custom_call.1} parent=1 // pred_check
      _
    $region39: #{tpu_custom_call.1} parent=1 // pred_check_branch
      %219 = sbr.rel (0) target = $region41
    $region40: #{tpu_custom_call.1} parent=1 // pred_region
      %220 = dma.done [#allocation4], 256
    $region41: #{tpu_custom_call.1} parent=1 // pred_fallthru
      _
    %221 = vsyncpa [#allocation3], 1
    %222 = vsyncpa [#allocation6], 1
    %223 = vsyncpa [#allocation4], 1

// kernel: tpu_custom_call.1
$region0: #{tpu_custom_call.1}
  #allocation0 [shape = 'u32[]', space=smem, size = 0x4, offset = 0x4, fixed_abs, tag = 'smem constant byte address 0x4 - core index']
  #allocation1 [shape = 'u32[144,128]{1,0:T(1,128)}', space=vmem, size = 0x12000, scoped, tag = 'internal scratch']
  %s0 = inlined_call_operand.hbm [shape: f32[16,32], index: 0, kind: input, shape index: {}]
  %s1 = inlined_call_operand.hbm [shape: bf16[32,32], index: 1, kind: input, shape index: {}]
  %s2 = inlined_call_operand.vmem [shape: f32[1,32], index: 2, kind: input, shape index: {}]
  %s3 = inlined_call_operand.hbm [shape: bf16[32,128], index: 3, kind: input, shape index: {}]
  %s4 = inlined_call_operand.vmem [shape: f32[1,128], index: 4, kind: input, shape index: {}]
  %s5 = inlined_call_operand.hbm [shape: f32[16,128], index: 5, kind: output, shape index: {}]
  %s6 = sld [smem:[#allocation0]]
  $region42: #{tpu_custom_call.1} parent=0
    _
  %s8 = ssub.s32 1, %s6
  %s9 = scalar_select 0, %s8, %s6
  $region1: #{tpu_custom_call.1} parent=0
    #allocation2 [shape = 'u8[8192]{0}', space=vmem, size = 0x2000, scoped, tag = 'input window, operand 0, single buffered']
    #allocation3 [shape = 's32[1]{0}', space=sflag, size = 0x4, scoped, tag = 'scoped memory for tpu_custom_call.1']
    #allocation4 [shape = 's32[1]{0}', space=sflag, size = 0x4, scoped, tag = 'scoped memory for tpu_custom_call.1']
    #allocation5 [shape = 'u8[8192]{0}', space=vmem, size = 0x2000, scoped, tag = 'input window, operand 1, single buffered']
    #allocation6 [shape = 's32[1]{0}', space=sflag, size = 0x4, scoped, tag = 'scoped memory for tpu_custom_call.1']
    #allocation7 [shape = 'u8[8192]{0}', space=vmem, size = 0x2000, scoped, tag = 'input window, operand 3, single buffered']
    #allocation8 [shape = 'u8[8192]{0}', space=vmem, size = 0x2000, scoped, tag = 'output window, operand 0, single buffered']
    %10 = vsyncpa [#allocation3], 0
    %11 = vsyncpa [#allocation6], 0
    %12 = vsyncpa [#allocation4], 0
    // Predicated region
    $region2: #{tpu_custom_call.1} parent=1 // pred_check
      _
    $region3: #{tpu_custom_call.1} parent=1 // pred_check_branch
      %14 = sbr.rel (0) target = $region5
    $region4: #{tpu_custom_call.1} parent=1 // pred_region
      %s16 = ssub.s32 256, 256
      %17 = vsyncadd [#allocation3], %s16
      %s18 = sshll.u32 [#allocation2], 4
      %s19 = int_to_ptr.vmem [resolvable:$true] %s18
      %24 = dma.hbm_to_vmem [thread:$0]  %s0, 256, %s19, [#allocation3], 128, 128, 8
    $region5: #{tpu_custom_call.1} parent=1 // pred_fallthru
      _
    // Predicated region
    $region6: #{tpu_custom_call.1} parent=1 // pred_check
      _
    $region7: #{tpu_custom_call.1} parent=1 // pred_check_branch
      %26 = sbr.rel (0) target = $region9
    $region8: #{tpu_custom_call.1} parent=1 // pred_region
      %s28 = ssub.s32 256, 256
      %29 = vsyncadd [#allocation6], %s28
      %s30 = sshll.u32 [#allocation5], 4
      %s31 = int_to_ptr.vmem [resolvable:$true] %s30
      %36 = dma.hbm_to_vmem [thread:$0]  %s1, 256, %s31, [#allocation6], 64, 64, 4
    $region9: #{tpu_custom_call.1} parent=1 // pred_fallthru
      _
    // Predicated region
    $region10: #{tpu_custom_call.1} parent=1 // pred_check
      _
    $region11: #{tpu_custom_call.1} parent=1 // pred_check_branch
      %38 = sbr.rel (0) target = $region13
    $region12: #{tpu_custom_call.1} parent=1 // pred_region
      _
    $region13: #{tpu_custom_call.1} parent=1 // pred_fallthru
      _
    // Predicated region
    $region14: #{tpu_custom_call.1} parent=1 // pred_check
      _
    $region15: #{tpu_custom_call.1} parent=1 // pred_check_branch
      %40 = sbr.rel (0) target = $region17
    $region16: #{tpu_custom_call.1} parent=1 // pred_region
      %s42 = ssub.s32 256, 256
      %43 = vsyncadd [#allocation6], %s42
      %s44 = sshll.u32 [#allocation7], 4
      %s45 = int_to_ptr.vmem [resolvable:$true] %s44
      %50 = dma.hbm_to_vmem [thread:$0]  %s3, 256, %s45, [#allocation6], 64, 64, 4
    $region17: #{tpu_custom_call.1} parent=1 // pred_fallthru
      _
    // Predicated region
    $region18: #{tpu_custom_call.1} parent=1 // pred_check
      _
    $region19: #{tpu_custom_call.1} parent=1 // pred_check_branch
      %52 = sbr.rel (0) target = $region21
    $region20: #{tpu_custom_call.1} parent=1 // pred_region
      _
    $region21: #{tpu_custom_call.1} parent=1 // pred_fallthru
      _
    // Predicated region
    $region22: #{tpu_custom_call.1} parent=1 // pred_check
      _
    $region23: #{tpu_custom_call.1} parent=1 // pred_check_branch
      %54 = sbr.rel (0) target = $region25
    $region24: #{tpu_custom_call.1} parent=1 // pred_region
      %55 = dma.done [#allocation3], 256
    $region25: #{tpu_custom_call.1} parent=1 // pred_fallthru
      _
    // Predicated region
    $region26: #{tpu_custom_call.1} parent=1 // pred_check
      _
    $region27: #{tpu_custom_call.1} parent=1 // pred_check_branch
      %57 = sbr.rel (0) target = $region29
    $region28: #{tpu_custom_call.1} parent=1 // pred_region
      %58 = dma.done [#allocation6], 256
    $region29: #{tpu_custom_call.1} parent=1 // pred_fallthru
      _
    // Predicated region
    $region30: #{tpu_custom_call.1} parent=1 // pred_check
      _
    $region31: #{tpu_custom_call.1} parent=1 // pred_check_branch
      %60 = sbr.rel (0) target = $region33
    $region32: #{tpu_custom_call.1} parent=1 // pred_region
      %61 = dma.done [#allocation6], 256
    $region33: #{tpu_custom_call.1} parent=1 // pred_fallthru
      _
    %v63 = vld [vmem:[#allocation2] sm:$0xff]
    %v64 = vld [vmem:[#allocation2 + $0x8] sm:$0xff]
    %v65 = vpack.c.bf16 %v64, %v63
    %v66 = vld [vmem:[#allocation5] sm:$0xf]
    %v67 = vld [vmem:[#allocation5 + $0x4] sm:$0xf]
    %v68 = vld [vmem:[#allocation5 + $0x8] sm:$0xf]
    %v69 = vld [vmem:[#allocation5 + $0xc] sm:$0xf]
    %v70 = vld [vmem:[%s2] sm:$0x1]
    %v72 = vlaneseq
    %v73 = vshrl.u32 %v72, 7
    %v74 = vsub.s32 0, %v73
    %v75 = vrot.slane %v70, %v74
    %v81 = vunpack.c.l.b16 %v66
    %v82 = vunpack.c.l.b16 %v67
    %v83 = vunpack.c.l.b16 %v68
    %v84 = vunpack.c.l.b16 %v69
    %v85 = vpack.c.b16 %v82, %v81
    %v86 = vpack.c.b16 %v84, %v83
    %vm89 = vcmask 261120
    %v91 = vsel %vm89, %v65, 0
    %93 = vmatprep.subr.bf16.mxu0 0
    %94 = vmatpush1.bf16.msra.mxu0 %v85
    %95 = vmatprep.subr.bf16.mxu0 0
    %96 = vmatpush1.bf16.msra.mxu0 %v86
    %97 = vmatprep.subr.bf16.mxu0 0
    %98 = vmatpush1.bf16.msra.mxu0 0
    %99 = vmatprep.subr.bf16.mxu0 0
    %100 = vmatpush1.bf16.msra.mxu0 0
    %101 = vmatprep.subr.bf16.mxu0 0
    %102 = vmatpush1.bf16.msra.mxu0 0
    %103 = vmatprep.subr.bf16.mxu0 0
    %104 = vmatpush1.bf16.msra.mxu0 0
    %105 = vmatprep.subr.bf16.mxu0 0
    %106 = vmatpush1.bf16.msra.mxu0 0
    %107 = vmatprep.subr.bf16.mxu0 0
    %108 = vmatpush1.bf16.msra.mxu0 0
    %109 = vmatprep.subr.bf16.mxu0 0
    %110 = vmatpush1.bf16.msra.mxu0 0
    %111 = vmatprep.subr.bf16.mxu0 0
    %112 = vmatpush1.bf16.msra.mxu0 0
    %113 = vmatprep.subr.bf16.mxu0 0
    %114 = vmatpush1.bf16.msra.mxu0 0
    %115 = vmatprep.subr.bf16.mxu0 0
    %116 = vmatpush1.bf16.msra.mxu0 0
    %117 = vmatprep.subr.bf16.mxu0 0
    %118 = vmatpush1.bf16.msra.mxu0 0
    %119 = vmatprep.subr.bf16.mxu0 0
    %120 = vmatpush1.bf16.msra.mxu0 0
    %121 = vmatprep.subr.bf16.mxu0 0
    %122 = vmatpush1.bf16.msra.mxu0 0
    %123 = vmatprep.subr.bf16.mxu0 0
    %124 = vmatpush1.bf16.msra.mxu0 0
    %125 = vmatprep.mubr.bf16.mxu0 0
    %126 = vmatmul.mubr.bf16.gmra.mrb[0].mxu0 %v91
    %v127 = vpop.f32.mrb[0].mxu0
    %v128 = vadd.f32 %v75, %v127
    %v129 = vpop.f32.mrb[0].mxu0
    %v130 = vpop.f32.mrb[0].mxu0
    %v131 = vadd.f32 %v75, %v130
    %v132 = vpop.f32.mrb[0].mxu0
    %133 = vdwg.mxu0
    %v134 = vtanh.pop %v128
    %v135 = vtanh.pop %v131
    %v136 = vpack.c.bf16 %v135, %v134
    %v137 = vld [vmem:[#allocation7] sm:$0xf]
    %v138 = vld [vmem:[#allocation7 + $0x4] sm:$0xf]
    %v139 = vld [vmem:[#allocation7 + $0x8] sm:$0xf]
    %v140 = vld [vmem:[#allocation7 + $0xc] sm:$0xf]
    %v141 = vld [vmem:[%s4] sm:$0x1]
    %v143 = vlaneseq
    %v144 = vshrl.u32 %v143, 7
    %v145 = vsub.s32 0, %v144
    %v146 = vrot.slane %v141, %v145
    %v152 = vunpack.c.l.b16 %v137
    %v153 = vunpack.c.l.b16 %v138
    %v154 = vunpack.c.l.b16 %v139
    %v155 = vunpack.c.l.b16 %v140
    %v156 = vpack.c.b16 %v153, %v152
    %v157 = vpack.c.b16 %v155, %v154
    %v161 = vsel %vm89, %v136, 0
    %163 = vmatprep.subr.bf16.mxu0 0
    %164 = vmatpush1.bf16.msra.mxu0 %v156
    %165 = vmatprep.subr.bf16.mxu0 0
    %166 = vmatpush1.bf16.msra.mxu0 %v157
    %167 = vmatprep.subr.bf16.mxu0 0
    %168 = vmatpush1.bf16.msra.mxu0 0
    %169 = vmatprep.subr.bf16.mxu0 0
    %170 = vmatpush1.bf16.msra.mxu0 0
    %171 = vmatprep.subr.bf16.mxu0 0
    %172 = vmatpush1.bf16.msra.mxu0 0
    %173 = vmatprep.subr.bf16.mxu0 0
    %174 = vmatpush1.bf16.msra.mxu0 0
    %175 = vmatprep.subr.bf16.mxu0 0
    %176 = vmatpush1.bf16.msra.mxu0 0
    %177 = vmatprep.subr.bf16.mxu0 0
    %178 = vmatpush1.bf16.msra.mxu0 0
    %179 = vmatprep.subr.bf16.mxu0 0
    %180 = vmatpush1.bf16.msra.mxu0 0
    %181 = vmatprep.subr.bf16.mxu0 0
    %182 = vmatpush1.bf16.msra.mxu0 0
    %183 = vmatprep.subr.bf16.mxu0 0
    %184 = vmatpush1.bf16.msra.mxu0 0
    %185 = vmatprep.subr.bf16.mxu0 0
    %186 = vmatpush1.bf16.msra.mxu0 0
    %187 = vmatprep.subr.bf16.mxu0 0
    %188 = vmatpush1.bf16.msra.mxu0 0
    %189 = vmatprep.subr.bf16.mxu0 0
    %190 = vmatpush1.bf16.msra.mxu0 0
    %191 = vmatprep.subr.bf16.mxu0 0
    %192 = vmatpush1.bf16.msra.mxu0 0
    %193 = vmatprep.subr.bf16.mxu0 0
    %194 = vmatpush1.bf16.msra.mxu0 0
    %195 = vmatprep.mubr.bf16.mxu0 0
    %196 = vmatmul.mubr.bf16.gmra.mrb[0].mxu0 %v161
    %v197 = vpop.f32.mrb[0].mxu0
    %v198 = vadd.f32 %v146, %v197
    %v199 = vpop.f32.mrb[0].mxu0
    %v200 = vpop.f32.mrb[0].mxu0
    %v201 = vadd.f32 %v146, %v200
    %v202 = vpop.f32.mrb[0].mxu0
    %203 = vdwg.mxu0
    %204 = vst [vmem:[#allocation8] sm:$0xff] %v198
    %205 = vst [vmem:[#allocation8 + $0x8] sm:$0xff] %v201
    // Predicated region
    $region34: #{tpu_custom_call.1} parent=1 // pred_check
      _
    $region35: #{tpu_custom_call.1} parent=1 // pred_check_branch
      %207 = sbr.rel (0) target = $region37
    $region36: #{tpu_custom_call.1} parent=1 // pred_region
      %s209 = ssub.s32 256, 256
      %210 = vsyncadd [#allocation4], %s209
      %s211 = sshll.u32 [#allocation8], 4
      %s212 = int_to_ptr.vmem [resolvable:$true] %s211
      %217 = dma.vmem_to_hbm [thread:$0]  %s212, 256, %s5, [#allocation4], 128, 128, 8
    $region37: #{tpu_custom_call.1} parent=1 // pred_fallthru
      _
    // Predicated region
    $region38: #{tpu_custom_call.1} parent=1 // pred_check
      _
    $region39: #{tpu_custom_call.1} parent=1 // pred_check_branch
      %219 = sbr.rel (0) target = $region41
    $region40: #{tpu_custom_call.1} parent=1 // pred_region
      %220 = dma.done [#allocation4], 256
    $region41: #{tpu_custom_call.1} parent=1 // pred_fallthru
      _
    %221 = vsyncpa [#allocation3], 1
    %222 = vsyncpa [#allocation6], 1
    %223 = vsyncpa [#allocation4], 1

</llo_original>
